<compile_context>
chip_gen: v7x
topology: tpu7x:2x2x1
jax: 0.10.0
libtpu: 0.0.40
codegen_flags: <defaults>
</compile_context>

<pallas_src>
import jax
import jax.numpy as jnp
from jax import lax
from jax.experimental import pallas as pl
from jax.experimental.pallas import tpu as pltpu


# ---------------------------------------------------------------------------
# Kernel
# ---------------------------------------------------------------------------
def decoder_seq_kernel(eid_ref, rate_ref, h0_ref, w_ref, hist_ref, h_scr):
    """Runs one GRU decoder step per grid iteration t.

    PyTorch nn.GRUCell semantics (gate order [r, z, n]):
        r  = sigmoid(W_ir x + b_ir + W_hr h + b_hr)
        z  = sigmoid(W_iz x + b_iz + W_hz h + b_hz)
        n  = tanh(W_in x + b_in + r * (W_hn h + b_hn))
        h' = (1 - z) * n + z * h
    realized via a single combined matmul:
        pre = [one_hot | h | rate | 1] @ W_comb        # (B, 4H) f32 accum
        pre[:, :2H]   == rz pre-activations (incl. biases)
        pre[:, 2H:3H] == W_in x + b_in
        pre[:, 3H:4H] == W_hn h + b_hn
    """
    t = pl.program_id(0)
    B, H = h_scr.shape
    E = w_ref.shape[0] - H - 2

    @pl.when(t == 0)
    def _():
        h_scr[...] = h0_ref[...].astype(jnp.float32)

    ids = eid_ref[0]                                   # (B, 1) int32
    rate = rate_ref[0].astype(jnp.bfloat16)            # (B, 1)

    # Embedding gather as a one-hot row select (pre-composed table -> MXU).
    col = lax.broadcasted_iota(jnp.int32, (B, E), 1)   # (B, E)
    one_hot = (ids == col).astype(jnp.bfloat16)        # (B, E), exact in bf16

    h = h_scr[...]                                     # (B, H) f32 carry

    # Single combined (B, E+H+2) x (E+H+2, 4H) bf16 matmul, f32 accumulation.
    x = jnp.concatenate(
        [one_hot, h.astype(jnp.bfloat16), rate, jnp.ones((B, 1), jnp.bfloat16)],
        axis=1)                                        # (B, E+H+2)
    pre = jnp.dot(x, w_ref[...], preferred_element_type=jnp.float32)  # (B, 4H)

    # Gate math in f32 on the VPU/EUP.
    # (Column order [r|z|gi_n|gh_n]; lane-offset slices are handled by the XLU,
    #  which has slack relative to the VPU at this size.)
    rz = jax.nn.sigmoid(pre[:, :2 * H])
    r = rz[:, :H]
    z = rz[:, H:]
    n = jnp.tanh(pre[:, 2 * H:3 * H] + r * pre[:, 3 * H:])
    h_new = (1.0 - z) * n + z * h

    h_scr[...] = h_new
    hist_ref[pl.ds(t, 1), :, :] = h_new[None].astype(hist_ref.dtype)


# ---------------------------------------------------------------------------
# Wrappers
# ---------------------------------------------------------------------------
def decoder_forward_seq(params, eid_seq, rate_seq, hidden0):
    """Fused T-step decode.  eid_seq: (T,B) int32, rate_seq: (T,B) f32,
    hidden0: (B,H) f32  ->  (T,B,H) f32 (hidden after each step)."""
    T, B = eid_seq.shape
    H = params.hidden_dim
    W = params.w_comb                                  # (E+H+2, 4H) bf16

    eid3 = eid_seq.astype(jnp.int32)[:, :, None]       # (T, B, 1)
    rate3 = rate_seq.astype(jnp.float32)[:, :, None]   # (T, B, 1)

    grid_spec = pltpu.PrefetchScalarGridSpec(
        num_scalar_prefetch=0,
        grid=(T,),
        in_specs=[
            pl.BlockSpec((1, B, 1), lambda t: (t, 0, 0)),     # eid[t]
            pl.BlockSpec((1, B, 1), lambda t: (t, 0, 0)),     # rate[t]
            pl.BlockSpec((B, H), lambda t: (0, 0)),           # h0 (resident)
            pl.BlockSpec(W.shape, lambda t: (0, 0)),          # W_comb (resident)
        ],
        # Constant out index_map -> output slab stays resident in VMEM across
        # the whole grid; one HBM writeback at the end (no per-step ragged DMA).
        out_specs=pl.BlockSpec((T, B, H), lambda t: (0, 0, 0)),
        scratch_shapes=[pltpu.VMEM((B, H), jnp.float32)],      # carried hidden
    )

    return pl.pallas_call(
        decoder_seq_kernel,
        out_shape=jax.ShapeDtypeStruct((T, B, H), hidden0.dtype),
        grid_spec=grid_spec,
        compiler_params=pltpu.CompilerParams(
            dimension_semantics=("arbitrary",)),
    )(eid3, rate3, hidden0, W)


def decoder_forward(params, eid, rate, hidden):
    """Module-equivalent single step: eid (B,), rate (B,), hidden (B,H) -> (B,H)."""
    hist = decoder_forward_seq(params, eid[None, :], rate[None, :], hidden)
    return hist[0]


# ---------------------------------------------------------------------------
# Parameters (mirrors the PyTorch module init) + kernel-prepped combined weight
# ---------------------------------------------------------------------------
def _build_combined_weight(embedding, w_ih_t, w_hh_t, b_ih, b_hh, emb_dim, H):
    """(E + H + 2, 4H) bf16 combined weight.
    columns: [0:2H]=rz, [2H:3H]=gi_n(+b_in), [3H:4H]=gh_n(+b_hn)
    rows:    [0:E]=table@W_emb^T, [E:E+H]=W_hh^T, [E+H]=rate row, [E+H+1]=bias."""
    E = embedding.shape[0]
    w_emb_t = w_ih_t[:emb_dim, :]                      # (emb_dim, 3H)
    w_rate = w_ih_t[emb_dim:, :]                       # (1, 3H)
    table_gates = embedding @ w_emb_t                  # (E, 3H)  (eval dropout)

    W = jnp.zeros((E + H + 2, 4 * H), jnp.float32)
    W = W.at[:E, :3 * H].set(table_gates)                        # gi_{r,z,n}
    W = W.at[E:E + H, :2 * H].set(w_hh_t[:, :2 * H])             # gh_{r,z}
    W = W.at[E:E + H, 3 * H:].set(w_hh_t[:, 2 * H:])             # gh_n
    W = W.at[E + H, :3 * H].set(w_rate[0])                       # rate -> gi only
    W = W.at[E + H + 1, :2 * H].set(b_ih[0, :2 * H] + b_hh[0, :2 * H])  # b_rz
    W = W.at[E + H + 1, 2 * H:3 * H].set(b_ih[0, 2 * H:])               # b_in
    W = W.at[E + H + 1, 3 * H:].set(b_hh[0, 2 * H:])                    # b_hn
    return W.astype(jnp.bfloat16)


class DecoderParams:
    """Deterministic parameter container mirroring the PyTorch module, plus the
    kernel-prepped combined weight."""

    def __init__(self, key, eid_size, rate_size, emb_dim, hidden_dim):
        assert rate_size == 1, "module does rate.unsqueeze(1) -> rate_size == 1"
        self.eid_size = eid_size
        self.rate_size = rate_size
        self.emb_dim = emb_dim
        self.hidden_dim = hidden_dim
        in_dim = emb_dim + rate_size
        H = hidden_dim

        k_emb, k_wih, k_whh, k_bih, k_bhh = jax.random.split(key, 5)
        # nn.Embedding init ~ N(0, 1)
        self.embedding = jax.random.normal(k_emb, (eid_size, emb_dim), jnp.float32)
        # nn.GRUCell init ~ U(-1/sqrt(H), 1/sqrt(H)); stored pre-transposed.
        bound = 1.0 / jnp.sqrt(jnp.float32(H))
        self.w_ih_t = jax.random.uniform(k_wih, (in_dim, 3 * H), jnp.float32, -bound, bound)
        self.w_hh_t = jax.random.uniform(k_whh, (H, 3 * H), jnp.float32, -bound, bound)
        self.b_ih = jax.random.uniform(k_bih, (1, 3 * H), jnp.float32, -bound, bound)
        self.b_hh = jax.random.uniform(k_bhh, (1, 3 * H), jnp.float32, -bound, bound)

        # Kernel-prepped combined weight (bf16).
        self.w_comb = _build_combined_weight(
            self.embedding, self.w_ih_t, self.w_hh_t, self.b_ih, self.b_hh,
            emb_dim, H)


# ---------------------------------------------------------------------------
# Pure-JAX references
# ---------------------------------------------------------------------------
def _reference_decoder_f32(params, eid, rate, hidden):
    """Exact f32 PyTorch-semantics reference (eval-mode dropout = identity)."""
    emb = jnp.take(params.embedding, eid, axis=0)
    x = jnp.concatenate([emb, rate[:, None].astype(jnp.float32)], axis=1)
    gi = x @ params.w_ih_t + params.b_ih
    gh = hidden @ params.w_hh_t + params.b_hh
    H = params.hidden_dim
    r = jax.nn.sigmoid(gi[:, :H] + gh[:, :H])
    z = jax.nn.sigmoid(gi[:, H:2 * H] + gh[:, H:2 * H])
    n = jnp.tanh(gi[:, 2 * H:] + r * gh[:, 2 * H:])
    return (1.0 - z) * n + z * hidden


def _reference_decoder_bf16(params, eid, rate, hidden):
    """Pure-JAX version of the exact kernel math (bf16 combined matmul)."""
    B = hidden.shape[0]
    H = params.hidden_dim
    E = params.eid_size
    one_hot = (eid[:, None] == jnp.arange(E)[None, :]).astype(jnp.bfloat16)
    x = jnp.concatenate(
        [one_hot, hidden.astype(jnp.bfloat16),
         rate[:, None].astype(jnp.bfloat16), jnp.ones((B, 1), jnp.bfloat16)],
        axis=1)
    pre = jnp.dot(x, params.w_comb, preferred_element_type=jnp.float32)
    rz = jax.nn.sigmoid(pre[:, :2 * H])
    r, z = rz[:, :H], rz[:, H:]
    n = jnp.tanh(pre[:, 2 * H:3 * H] + r * pre[:, 3 * H:])
    return (1.0 - z) * n + z * hidden


def _reference_seq(step_fn, params, eid_seq, rate_seq, hidden):
    hs = []
    h = hidden
    for t in range(eid_seq.shape[0]):
        h = step_fn(params, eid_seq[t], rate_seq[t], h)
        hs.append(h)
    return jnp.stack(hs, axis=0)


# ---------------------------------------------------------------------------
# Self-test
# ---------------------------------------------------------------------------
if __name__ == "__main__":
    B = 8
    EID_SIZE = 16        # params['eid_size']
    RATE_SIZE = 1        # params['rate_size'] (rate is (B,) -> unsqueeze(1))
    EMB_DIM = 32         # params['embedding_size']
    HIDDEN = 32          # params['hidden_size']
    T = 16               # decode steps for the sequence-fused kernel

    key = jax.random.PRNGKey(0)
    k_par, k_eid, k_rate, k_hid, k_eseq, k_rseq = jax.random.split(key, 6)

    params = DecoderParams(k_par, EID_SIZE, RATE_SIZE, EMB_DIM, HIDDEN)

    eid = jax.random.randint(k_eid, (B,), 0, EID_SIZE, dtype=jnp.int32)
    rate = jax.random.normal(k_rate, (B,), jnp.float32)
    hidden = jax.random.normal(k_hid, (B, HIDDEN), jnp.float32)

    # --- single step (module-equivalent forward) ---
    h1 = jax.block_until_ready(decoder_forward(params, eid, rate, hidden))
    assert h1.shape == (B, HIDDEN)
    ref_bf = _reference_decoder_bf16(params, eid, rate, hidden)
    ref_f32 = _reference_decoder_f32(params, eid, rate, hidden)
    assert jnp.allclose(h1, ref_bf, atol=5e-3), "step: kernel vs bf16 reference mismatch"
    assert jnp.allclose(h1, ref_f32, atol=5e-2), "step: kernel vs f32 reference mismatch"

    # --- fused T-step decode (hidden + weights resident in VMEM) ---
    eid_seq = jax.random.randint(k_eseq, (T, B), 0, EID_SIZE, dtype=jnp.int32)
    rate_seq = jax.random.normal(k_rseq, (T, B), jnp.float32)
    hist = jax.block_until_ready(decoder_forward_seq(params, eid_seq, rate_seq, hidden))
    assert hist.shape == (T, B, HIDDEN)
    ref_seq_bf = _reference_seq(_reference_decoder_bf16, params, eid_seq, rate_seq, hidden)
    ref_seq_f32 = _reference_seq(_reference_decoder_f32, params, eid_seq, rate_seq, hidden)
    assert jnp.allclose(hist, ref_seq_bf, atol=1e-2), "seq: kernel vs bf16 reference mismatch"
    assert jnp.allclose(hist, ref_seq_f32, atol=2e-1), "seq: kernel vs f32 reference mismatch"

    print("KERNEL_OK")
</pallas_src>

<mosaic_0001>
module attributes {stable_mosaic.version = 11 : i64} {
  func.func @decoder_seq_kernel(%arg0: i32, %arg1: memref<1x8x1xi32, #tpu.memory_space<vmem>>, %arg2: memref<1x8x1xf32, #tpu.memory_space<vmem>>, %arg3: memref<8x32xf32, #tpu.memory_space<vmem>>, %arg4: memref<50x128xbf16, #tpu.memory_space<vmem>>, %arg5: memref<1x8x32xf32, #tpu.memory_space<vmem>>, %arg6: memref<8x32xf32, #tpu.memory_space<vmem>>) attributes {dimension_semantics = [#tpu.dimension_semantics<arbitrary>], iteration_bounds = array<i64: 1>, scalar_prefetch = 0 : i64, scratch_operands = 1 : i64, tpu.core_type = #tpu.core_type<tc>, window_params = [{transform_indices = @transform_0, window_bounds = array<i64: 1, 8, 1>}, {transform_indices = @transform_1, window_bounds = array<i64: 1, 8, 1>}, {pipeline_mode = #tpu.pipeline_mode<synchronous>, transform_indices = @transform_2, window_bounds = array<i64: 8, 32>}, {pipeline_mode = #tpu.pipeline_mode<synchronous>, transform_indices = @transform_3, window_bounds = array<i64: 50, 128>}, {pipeline_mode = #tpu.pipeline_mode<synchronous>, transform_indices = @transform_4, window_bounds = array<i64: 1, 8, 32>}]} {
    %c0_i32 = arith.constant 0 : i32
    %0 = arith.cmpi eq, %arg0, %c0_i32 : i32
    %1 = arith.extui %0 : i1 to i32
    %c0_i32_0 = arith.constant 0 : i32
    %2 = arith.cmpi ne, %1, %c0_i32_0 : i32
    scf.if %2 {
      %c0_17 = arith.constant 0 : index
      %c0_18 = arith.constant 0 : index
      %42 = vector.load %arg3[%c0_17, %c0_18] : memref<8x32xf32, #tpu.memory_space<vmem>>, vector<8x32xf32>
      %c0_19 = arith.constant 0 : index
      %c0_20 = arith.constant 0 : index
      %43 = vector.load %arg6[%c0_19, %c0_20] : memref<8x32xf32, #tpu.memory_space<vmem>>, vector<8x32xf32>
      tpu.vector_store %arg6[%c0_19, %c0_20], %42 {strides = array<i32>} : memref<8x32xf32, #tpu.memory_space<vmem>>, vector<8x32xf32>,
    } else {
    }
    %c0 = arith.constant 0 : index
    %c0_1 = arith.constant 0 : index
    %c0_2 = arith.constant 0 : index
    %3 = vector.load %arg1[%c0, %c0_1, %c0_2] : memref<1x8x1xi32, #tpu.memory_space<vmem>>, vector<1x8x1xi32>
    %4 = vector.shape_cast %3 : vector<1x8x1xi32> to vector<8x1xi32>
    %c0_3 = arith.constant 0 : index
    %c0_4 = arith.constant 0 : index
    %c0_5 = arith.constant 0 : index
    %5 = vector.load %arg2[%c0_3, %c0_4, %c0_5] : memref<1x8x1xf32, #tpu.memory_space<vmem>>, vector<1x8x1xf32>
    %6 = vector.shape_cast %5 : vector<1x8x1xf32> to vector<8x1xf32>
    %7 = arith.truncf %6 : vector<8x1xf32> to vector<8x1xbf16>
    %8 = tpu.iota {dimensions = array<i32: 1>} : vector<8x16xi32>
    %9 = vector.broadcast %4 : vector<8x1xi32> to vector<8x16xi32>
    %10 = arith.cmpi eq, %9, %8 : vector<8x16xi32>
    %11 = arith.extui %10 : vector<8x16xi1> to vector<8x16xi32>
    %12 = arith.sitofp %11 : vector<8x16xi32> to vector<8x16xf32>
    %13 = arith.truncf %12 : vector<8x16xf32> to vector<8x16xbf16>
    %c0_6 = arith.constant 0 : index
    %c0_7 = arith.constant 0 : index
    %14 = vector.load %arg6[%c0_6, %c0_7] : memref<8x32xf32, #tpu.memory_space<vmem>>, vector<8x32xf32>
    %15 = arith.truncf %14 : vector<8x32xf32> to vector<8x32xbf16>
    %cst = arith.constant 1.000000e+00 : bf16
    %16 = vector.broadcast %cst : bf16 to vector<8x1xbf16>
    %17 = tpu.concatenate %13, %15, %7, %16 in 1 : vector<8x16xbf16>, vector<8x32xbf16>, vector<8x1xbf16>, vector<8x1xbf16> -> vector<8x50xbf16>
    %c0_8 = arith.constant 0 : index
    %c0_9 = arith.constant 0 : index
    %18 = vector.load %arg4[%c0_8, %c0_9] : memref<50x128xbf16, #tpu.memory_space<vmem>>, vector<50x128xbf16>
    %cst_10 = arith.constant dense<0.000000e+00> : vector<8x128xf32>
    %19 = tpu.matmul %17, %18, %cst_10 {dimension_numbers = #tpu.dot_dimension_numbers<[1], [0], [0], [1], [0, 0, 1, 1], [], []>} : vector<8x50xbf16>, vector<50x128xbf16>, vector<8x128xf32> -> vector<8x128xf32>
    %20 = vector.extract_strided_slice %19 {offsets = [0, 0], sizes = [8, 64], strides = [1, 1]} : vector<8x128xf32> to vector<8x64xf32>
    %21 = arith.negf %20 : vector<8x64xf32>
    %22 = math.exp %21 : vector<8x64xf32>
    %cst_11 = arith.constant 1.000000e+00 : f32
    %23 = vector.broadcast %cst_11 : f32 to vector<8x64xf32>
    %24 = arith.addf %23, %22 : vector<8x64xf32>
    %25 = arith.divf %23, %24 : vector<8x64xf32>
    %26 = vector.extract_strided_slice %25 {offsets = [0, 0], sizes = [8, 32], strides = [1, 1]} : vector<8x64xf32> to vector<8x32xf32>
    %27 = vector.extract_strided_slice %25 {offsets = [0, 32], sizes = [8, 32], strides = [1, 1]} : vector<8x64xf32> to vector<8x32xf32>
    %28 = vector.extract_strided_slice %19 {offsets = [0, 64], sizes = [8, 32], strides = [1, 1]} : vector<8x128xf32> to vector<8x32xf32>
    %29 = vector.extract_strided_slice %19 {offsets = [0, 96], sizes = [8, 32], strides = [1, 1]} : vector<8x128xf32> to vector<8x32xf32>
    %30 = arith.mulf %26, %29 : vector<8x32xf32>
    %31 = arith.addf %28, %30 : vector<8x32xf32>
    %32 = math.tanh %31 : vector<8x32xf32>
    %cst_12 = arith.constant 1.000000e+00 : f32
    %33 = vector.broadcast %cst_12 : f32 to vector<8x32xf32>
    %34 = arith.subf %33, %27 : vector<8x32xf32>
    %35 = arith.mulf %34, %32 : vector<8x32xf32>
    %36 = arith.mulf %27, %14 : vector<8x32xf32>
    %37 = arith.addf %35, %36 : vector<8x32xf32>
    %c0_13 = arith.constant 0 : index
    %c0_14 = arith.constant 0 : index
    %38 = vector.load %arg6[%c0_13, %c0_14] : memref<8x32xf32, #tpu.memory_space<vmem>>, vector<8x32xf32>
    tpu.vector_store %arg6[%c0_13, %c0_14], %37 {strides = array<i32>} : memref<8x32xf32, #tpu.memory_space<vmem>>, vector<8x32xf32>,
    %39 = vector.shape_cast %37 : vector<8x32xf32> to vector<1x8x32xf32>
    %40 = arith.index_cast %arg0 : i32 to index
    %c0_15 = arith.constant 0 : index
    %c0_16 = arith.constant 0 : index
    %41 = vector.load %arg5[%40, %c0_15, %c0_16] : memref<1x8x32xf32, #tpu.memory_space<vmem>>, vector<1x8x32xf32>
    tpu.vector_store %arg5[%40, %c0_15, %c0_16], %39 {strides = array<i32>} : memref<1x8x32xf32, #tpu.memory_space<vmem>>, vector<1x8x32xf32>,
    return
  }
  func.func @transform_0(%arg0: i32) -> (i32, i32, i32) {
    %c0_i32 = arith.constant 0 : i32
    %c0_i32_0 = arith.constant 0 : i32
    %c0_i32_1 = arith.constant 0 : i32
    return %arg0, %c0_i32, %c0_i32_0 : i32, i32, i32
  }
  func.func @transform_1(%arg0: i32) -> (i32, i32, i32) {
    %c0_i32 = arith.constant 0 : i32
    %c0_i32_0 = arith.constant 0 : i32
    %c0_i32_1 = arith.constant 0 : i32
    return %arg0, %c0_i32, %c0_i32_0 : i32, i32, i32
  }
  func.func @transform_2(%arg0: i32) -> (i32, i32) {
    %c0_i32 = arith.constant 0 : i32
    %c0_i32_0 = arith.constant 0 : i32
    %c0_i32_1 = arith.constant 0 : i32
    return %c0_i32, %c0_i32_0 : i32, i32
  }
  func.func @transform_3(%arg0: i32) -> (i32, i32) {
    %c0_i32 = arith.constant 0 : i32
    %c0_i32_0 = arith.constant 0 : i32
    %c0_i32_1 = arith.constant 0 : i32
    return %c0_i32, %c0_i32_0 : i32, i32
  }
  func.func @transform_4(%arg0: i32) -> (i32, i32, i32) {
    %c0_i32 = arith.constant 0 : i32
    %c0_i32_0 = arith.constant 0 : i32
    %c0_i32_1 = arith.constant 0 : i32
    %c0_i32_2 = arith.constant 0 : i32
    return %c0_i32, %c0_i32_0, %c0_i32_1 : i32, i32, i32
  }
}

</mosaic_0001>

<llo_original>
// kernel: tpu_custom_call.1
$region0: #{tpu_custom_call.1}
  #allocation0 [shape = 'u32[]', space=smem, size = 0x4, offset = 0x4, fixed_abs, tag = 'smem constant byte address 0x4 - core index']
  #allocation1 [shape = 'u32[144,128]{1,0:T(1,128)}', space=vmem, size = 0x12000, scoped, tag = 'internal scratch']
  #allocation2 [shape = 'f32[8,32]{1,0:T(8,128)}', space=vmem, size = 0x1000, scoped, tag = 'scratch operand']
  %s0 = inlined_call_operand.vmem [shape: s32[1,8,1], index: 0, kind: input, shape index: {}]
  %s1 = inlined_call_operand.vmem [shape: f32[1,8,1], index: 1, kind: input, shape index: {}]
  %s2 = inlined_call_operand.hbm [shape: f32[8,32], index: 2, kind: input, shape index: {}]
  %s3 = inlined_call_operand.vmem [shape: bf16[50,128], index: 3, kind: input, shape index: {}]
  %s4 = inlined_call_operand.hbm [shape: f32[1,8,32], index: 4, kind: output, shape index: {}]
  %s5 = sld [smem:[#allocation0]]
  $region34: #{tpu_custom_call.1} parent=0
    _
  %s7 = ssub.s32 1, %s5
  %s8 = scalar_select 0, %s7, %s5
  $region1: #{tpu_custom_call.1} parent=0
    #allocation3 [shape = 'u8[4096]{0}', space=vmem, size = 0x1000, scoped, tag = 'input window, operand 2, single buffered']
    #allocation4 [shape = 's32[1]{0}', space=sflag, size = 0x4, scoped, tag = 'scoped memory for tpu_custom_call.1']
    #allocation5 [shape = 's32[1]{0}', space=sflag, size = 0x4, scoped, tag = 'scoped memory for tpu_custom_call.1']
    #allocation6 [shape = 'u8[4096]{0}', space=vmem, size = 0x1000, scoped, tag = 'output window, operand 0, single buffered']
    %9 = vsyncpa [#allocation4], 0
    %10 = vsyncpa [#allocation5], 0
    // Predicated region
    $region2: #{tpu_custom_call.1} parent=1 // pred_check
      _
    $region3: #{tpu_custom_call.1} parent=1 // pred_check_branch
      %12 = sbr.rel (0) target = $region5
    $region4: #{tpu_custom_call.1} parent=1 // pred_region
      _
    $region5: #{tpu_custom_call.1} parent=1 // pred_fallthru
      _
    // Predicated region
    $region6: #{tpu_custom_call.1} parent=1 // pred_check
      _
    $region7: #{tpu_custom_call.1} parent=1 // pred_check_branch
      %14 = sbr.rel (0) target = $region9
    $region8: #{tpu_custom_call.1} parent=1 // pred_region
      _
    $region9: #{tpu_custom_call.1} parent=1 // pred_fallthru
      _
    // Predicated region
    $region10: #{tpu_custom_call.1} parent=1 // pred_check
      _
    $region11: #{tpu_custom_call.1} parent=1 // pred_check_branch
      %16 = sbr.rel (0) target = $region13
    $region12: #{tpu_custom_call.1} parent=1 // pred_region
      %s18 = ssub.s32 128, 128
      %19 = vsyncadd [#allocation4], %s18
      %s21 = sshll.u32 [#allocation3], 4
      %s22 = int_to_ptr.vmem [resolvable:$true] %s21
      %24 = dma.hbm_to_vmem [thread:$0]  %s2, 128, %s22, [#allocation4]
    $region13: #{tpu_custom_call.1} parent=1 // pred_fallthru
      _
    // Predicated region
    $region14: #{tpu_custom_call.1} parent=1 // pred_check
      _
    $region15: #{tpu_custom_call.1} parent=1 // pred_check_branch
      %26 = sbr.rel (0) target = $region17
    $region16: #{tpu_custom_call.1} parent=1 // pred_region
      _
    $region17: #{tpu_custom_call.1} parent=1 // pred_fallthru
      _
    // Predicated region
    $region18: #{tpu_custom_call.1} parent=1 // pred_check
      _
    $region19: #{tpu_custom_call.1} parent=1 // pred_check_branch
      %28 = sbr.rel (0) target = $region21
    $region20: #{tpu_custom_call.1} parent=1 // pred_region
      %29 = dma.done [#allocation4], 128
    $region21: #{tpu_custom_call.1} parent=1 // pred_fallthru
      _
    %p32 = scmp.eq.s32.totalorder 0, 0
    // Predicated region
    $region22: #{tpu_custom_call.1} parent=1 // pred_check
      %p33 = pneg %p32
    $region23: #{tpu_custom_call.1} parent=1 // pred_check_branch
      %35 = sbr.rel (%p33) target = $region25
    $region24: #{tpu_custom_call.1} parent=1 // pred_region
      %v36 = vld [vmem:[#allocation3] sm:$0xff]
      %vm37 = vcmask 261120
      %38 = vst.msk [vmem:[#allocation2] sm:$0xff] %vm37, %v36
    $region25: #{tpu_custom_call.1} parent=1 // pred_fallthru
      _
    %v39 = vld [vmem:[%s0] sm:$0xff]
    %v40 = vld [vmem:[%s1] sm:$0xff]
    %v41 = vpack.c.bf16 %v40, %v40
    %v42 = vlaneseq
    %v43 = vand.u32 %v42, 127
    %44 = vset.pattern.permute.xlu0 0
    %45 = vperm.xlu0 %44, %v39
    %v46 = vpop.permute.xlu0 %45
    %vm47 = vcmp.eq.s32.totalorder %v46, %v43
    %v48 = vsel %vm47, 1, 0
    %v49 = vcvt.s32.f32 %v48
    %v50 = vpack.c.bf16 %v49, %v49
    %v51 = vld [vmem:[#allocation2] sm:$0xff]
    %v52 = vpack.c.bf16 %v51, %v51
    %54 = vrot.lane.b32.xlu0 %v52, 16
    %v55 = vpop.permute.xlu0 %54
    %57 = vrot.lane.b32.xlu0 %v41, 48
    %v58 = vpop.permute.xlu0 %57
    %vm59 = vcmask 130048
    %v62 = vsel %vm59, %v50, %v55
    %vm63 = vcmask 392192
    %v65 = vsel %vm63, %v62, %v58
    %vm66 = vcmask 400384
    %v68 = vsel %vm66, %v65, 1065369472
    %v69 = vld [vmem:[%s3] sm:$0xf]
    %v70 = vld [vmem:[%s3 + $0x4] sm:$0xf]
    %v71 = vld [vmem:[%s3 + $0x8] sm:$0xf]
    %v72 = vld [vmem:[%s3 + $0xc] sm:$0xf]
    %v73 = vld [vmem:[%s3 + $0x10] sm:$0xf]
    %v74 = vld [vmem:[%s3 + $0x14] sm:$0xf]
    %v75 = vld [vmem:[%s3 + $0x18] sm:$0x1]
    %v83 = vunpack.c.l.b16 %v69
    %v84 = vunpack.c.l.b16 %v70
    %v85 = vunpack.c.l.b16 %v71
    %v86 = vunpack.c.l.b16 %v72
    %v87 = vunpack.c.l.b16 %v73
    %v88 = vunpack.c.l.b16 %v74
    %v89 = vunpack.c.l.b16 %v75
    %v90 = vpack.c.b16 %v84, %v83
    %v91 = vpack.c.b16 %v86, %v85
    %v92 = vpack.c.b16 %v88, %v87
    %v93 = vpack.c.b16 %v89, %v89
    %vm97 = vcmask 408576
    %v98 = vsel %vm97, %v68, 0
    %vm100 = vcmask 1040384
    %v102 = vsel %vm100, %v93, 0
    %104 = vmatprep.subr.bf16.mxu0 0
    %105 = vmatpush1.bf16.msra.mxu0 %v90
    %106 = vmatprep.subr.bf16.mxu0 0
    %107 = vmatpush1.bf16.msra.mxu0 %v91
    %108 = vmatprep.subr.bf16.mxu0 0
    %109 = vmatpush1.bf16.msra.mxu0 %v92
    %110 = vmatprep.subr.bf16.mxu0 0
    %111 = vmatpush1.bf16.msra.mxu0 %v102
    %112 = vmatprep.subr.bf16.mxu0 0
    %113 = vmatpush1.bf16.msra.mxu0 0
    %114 = vmatprep.subr.bf16.mxu0 0
    %115 = vmatpush1.bf16.msra.mxu0 0
    %116 = vmatprep.subr.bf16.mxu0 0
    %117 = vmatpush1.bf16.msra.mxu0 0
    %118 = vmatprep.subr.bf16.mxu0 0
    %119 = vmatpush1.bf16.msra.mxu0 0
    %120 = vmatprep.subr.bf16.mxu0 0
    %121 = vmatpush1.bf16.msra.mxu0 0
    %122 = vmatprep.subr.bf16.mxu0 0
    %123 = vmatpush1.bf16.msra.mxu0 0
    %124 = vmatprep.subr.bf16.mxu0 0
    %125 = vmatpush1.bf16.msra.mxu0 0
    %126 = vmatprep.subr.bf16.mxu0 0
    %127 = vmatpush1.bf16.msra.mxu0 0
    %128 = vmatprep.subr.bf16.mxu0 0
    %129 = vmatpush1.bf16.msra.mxu0 0
    %130 = vmatprep.subr.bf16.mxu0 0
    %131 = vmatpush1.bf16.msra.mxu0 0
    %132 = vmatprep.subr.bf16.mxu0 0
    %133 = vmatpush1.bf16.msra.mxu0 0
    %134 = vmatprep.subr.bf16.mxu0 0
    %135 = vmatpush1.bf16.msra.mxu0 0
    %136 = vmatprep.mubr.bf16.mxu0 0
    %137 = vmatmul.mubr.bf16.gmra.mrb[0].mxu0 %v98
    %v138 = vpop.f32.mrb[0].mxu0
    %v139 = vadd.f32 0.0, %v138
    %v140 = vpop.f32.mrb[0].mxu0
    %v141 = vpop.f32.mrb[0].mxu0
    %v142 = vpop.f32.mrb[0].mxu0
    %143 = vdwg.mxu0
    %v144 = vxor.u32 %v139, 2147483648
    %v145 = vmul.f32 %v144, 1.442695
    %v146 = vpow.pop %v145
    %v147 = vadd.f32 %v146, 1.0
    %v148 = vrcp.pop %v147
    %v149 = vmul.f32 1.0, %v148
    %151 = vrot.lane.b32.xlu0 %v139, 32
    %v152 = vpop.permute.xlu0 %151
    %v154 = vmul.f32 %v149, %v152
    %156 = vrot.lane.b32.xlu0 %v154, 64
    %v157 = vpop.permute.xlu0 %156
    %v159 = vadd.f32 %v139, %v157
    %v160 = vtanh.pop %v159
    %v161 = vsub.f32 1.0, %v149
    %163 = vrot.lane.b32.xlu0 %v160, 96
    %v164 = vpop.permute.xlu0 %163
    %v166 = vmul.f32 %v161, %v164
    %168 = vrot.lane.b32.xlu0 %v51, 32
    %v169 = vpop.permute.xlu0 %168
    %v171 = vmul.f32 %v149, %v169
    %v172 = vadd.f32 %v166, %v171
    %174 = vrot.lane.b32.xlu0 %v172, 96
    %v175 = vpop.permute.xlu0 %174
    %vm177 = vcmask 261120
    %178 = vst.msk [vmem:[#allocation2] sm:$0xff] %vm177, %v175
    %s179 = smul.u32 0, 8
    %s180 = scalar_lea.vmem [#allocation6], %s179
    %181 = vst.msk [vmem:[%s180] sm:$0xff] %vm177, %v175
    // Predicated region
    $region26: #{tpu_custom_call.1} parent=1 // pred_check
      _
    $region27: #{tpu_custom_call.1} parent=1 // pred_check_branch
      %183 = sbr.rel (0) target = $region29
    $region28: #{tpu_custom_call.1} parent=1 // pred_region
      %s185 = ssub.s32 128, 128
      %186 = vsyncadd [#allocation5], %s185
      %s188 = sshll.u32 [#allocation6], 4
      %s189 = int_to_ptr.vmem [resolvable:$true] %s188
      %191 = dma.vmem_to_hbm [thread:$0]  %s189, 128, %s4, [#allocation5]
    $region29: #{tpu_custom_call.1} parent=1 // pred_fallthru
      _
    // Predicated region
    $region30: #{tpu_custom_call.1} parent=1 // pred_check
      _
    $region31: #{tpu_custom_call.1} parent=1 // pred_check_branch
      %193 = sbr.rel (0) target = $region33
    $region32: #{tpu_custom_call.1} parent=1 // pred_region
      %194 = dma.done [#allocation5], 128
    $region33: #{tpu_custom_call.1} parent=1 // pred_fallthru
      _
    %195 = vsyncpa [#allocation4], 1
    %196 = vsyncpa [#allocation5], 1

</llo_original>
